<compile_context>
chip_gen: v5e
topology: v5e:2x2
jax: 0.10.0
libtpu: 0.0.40
codegen_flags: <defaults>
</compile_context>

<pallas_src>
import jax
import jax.numpy as jnp
from jax import lax
from jax.experimental import pallas as pl
from jax.experimental.pallas import tpu as pltpu


# ---------------------------------------------------------------------------
# Kernels
# ---------------------------------------------------------------------------

def _linear_kernel_multi_k(x_ref, w_ref, b_ref, o_ref, acc_ref):
    # x_ref: (TM, TK)  w_ref: (TN, TK)  b_ref: (1, TN)  o_ref: (TM, TN)
    k = pl.program_id(2)

    @pl.when(k == 0)
    def _():
        acc_ref[...] = jnp.zeros_like(acc_ref)

    # Contract the shared feature axis (dim 1 of both operands) == x @ w.T on
    # the MXU, without materializing a transposed weight copy in HBM.
    # TODO(synk): if the Mosaic bundle shows an exposed per-step vxpose on the
    # (TN, TK) weight tile, pre-transpose the weight to (in_f, out_f) once at
    # load time instead; usually hidden under MXU time.
    acc_ref[...] += lax.dot_general(
        x_ref[...], w_ref[...],
        dimension_numbers=(((1,), (1,)), ((), ())),
        preferred_element_type=jnp.float32)

    @pl.when(k == pl.num_programs(2) - 1)
    def _():
        o_ref[...] = (acc_ref[...] + b_ref[...].astype(jnp.float32)).astype(o_ref.dtype)


def _linear_kernel_single_k(x_ref, w_ref, b_ref, o_ref):
    # Fast path when the whole K axis fits one tile: no accumulator scratch,
    # no pl.when branches, single store.
    acc = lax.dot_general(
        x_ref[...], w_ref[...],
        dimension_numbers=(((1,), (1,)), ((), ())),
        preferred_element_type=jnp.float32)
    o_ref[...] = (acc + b_ref[...].astype(jnp.float32)).astype(o_ref.dtype)


# ---------------------------------------------------------------------------
# Tiling / parameter preparation
# ---------------------------------------------------------------------------

def _round_up(x, m):
    return ((x + m - 1) // m) * m


def _vmem_capacity_bytes():
    try:
        return int(pltpu.get_tpu_info().vmem_capacity_bytes)
    except Exception:
        return 64 * 1024 * 1024  # conservative fallback (v7x per-TC VMEM)


def _tile_targets():
    vmem = _vmem_capacity_bytes()
    if vmem >= 100 * 1024 * 1024:
        # v5e / v6e class: 128 MiB physical VMEM. Big tiles -> MXU-bound.
        return dict(tm=1024, tn=1024, tk=1024, vmem_limit=96 * 1024 * 1024)
    # v7x class: 64 MiB physical VMEM per TensorCore -> keep the
    # double-buffered footprint well under it.
    return dict(tm=1024, tn=1024, tk=512, vmem_limit=48 * 1024 * 1024)


def prepare_linear_params(weight, bias, *, compute_dtype=None,
                          tile_n=None, tile_k=None):
    """Pad/cast nn.Linear parameters ONCE at load time.

    weight: [out_features, in_features] (PyTorch layout, consumed directly)
    bias:   [out_features]
    compute_dtype: MXU feed dtype. Defaults to bf16 when the weight is f32
                   (f32 accumulation is preserved in the kernel).
    """
    out_f, in_f = weight.shape
    assert bias.shape == (out_f,)
    targets = _tile_targets()

    if compute_dtype is None:
        compute_dtype = jnp.bfloat16 if weight.dtype == jnp.float32 else weight.dtype

    if tile_k is None:
        tile_k = min(targets["tk"], _round_up(in_f, 128))
    if tile_n is None:
        tile_n = min(targets["tn"], _round_up(out_f, 128))

    # Pad K up to a multiple of tile_k (zeros are safe in the contraction) and
    # N up to a multiple of tile_n (lane-dense, unmasked output stores).
    in_p = _round_up(in_f, tile_k)
    out_p = _round_up(out_f, tile_n)

    w = weight.astype(compute_dtype)
    b = bias.astype(jnp.float32)
    if (out_p, in_p) != (out_f, in_f):
        w = jnp.pad(w, ((0, out_p - out_f), (0, in_p - in_f)))
    if out_p != out_f:
        b = jnp.pad(b, (0, out_p - out_f))
    b2d = b.reshape(1, out_p)

    return dict(w=w, b=b2d, in_f=in_f, out_f=out_f, in_p=in_p, out_p=out_p,
                tile_n=tile_n, tile_k=tile_k, compute_dtype=compute_dtype,
                tm_target=targets["tm"], vmem_limit=targets["vmem_limit"])


# ---------------------------------------------------------------------------
# Forward
# ---------------------------------------------------------------------------

def linear_forward(x, params, *, out_dtype=None, input_buffering=2,
                   force_pallas=False):
    """y = x @ weight.T + bias using prepared (padded/cast) parameters."""
    B, in_f = x.shape
    assert in_f == params["in_f"], "x feature dim does not match prepared weight"
    if out_dtype is None:
        out_dtype = x.dtype

    out_f, out_p, in_p = params["out_f"], params["out_p"], params["in_p"]
    tile_n, tile_k = params["tile_n"], params["tile_k"]
    w, b2d = params["w"], params["b"]
    compute_dtype = params["compute_dtype"]

    # Tiny problems: kernel-launch + per-grid-step overhead dominates; let XLA
    # fuse the whole thing instead.
    if not force_pallas and (2 * B * in_f * out_f) < (1 << 22):
        y = jnp.dot(x.astype(compute_dtype), w[:out_f, :in_f].T,
                    preferred_element_type=jnp.float32)
        return (y + b2d[0, :out_f]).astype(out_dtype)

    # Only x is padded/cast per call (weight/bias were prepared at load time).
    xc = x.astype(compute_dtype)
    if in_p != in_f:
        xc = jnp.pad(xc, ((0, 0), (0, in_p - in_f)))

    tm_target = params["tm_target"]
    tile_b = B if B <= tm_target else tm_target  # tm_target is a multiple of 8

    gm = pl.cdiv(B, tile_b)
    gn = out_p // tile_n
    gk = in_p // tile_k

    # v7x has 2 TensorCores sharded over the "parallel" grid axes; make sure
    # there is >= 2-way parallel work when the problem allows it.
    if gm == 1 and gn == 1 and tile_n % 256 == 0:
        tile_n //= 2
        gn = 2

    cd_size = jnp.dtype(compute_dtype).itemsize
    flops = 2 * B * in_f * out_f
    bytes_accessed = (B * in_p * cd_size * gn          # x streamed once per N tile
                      + out_p * in_p * cd_size * gm    # w streamed once per M tile
                      + out_p * 4                      # bias
                      + B * out_p * jnp.dtype(out_dtype).itemsize)
    cost = pl.CostEstimate(flops=flops, transcendentals=0,
                           bytes_accessed=bytes_accessed)

    buffered = (pl.Buffered(input_buffering)
                if input_buffering and input_buffering > 2 else None)

    def in_spec(shape, index_map):
        if buffered is not None:
            return pl.BlockSpec(shape, index_map, pipeline_mode=buffered)
        return pl.BlockSpec(shape, index_map)

    if gk == 1:
        out_padded = pl.pallas_call(
            _linear_kernel_single_k,
            out_shape=jax.ShapeDtypeStruct((B, out_p), out_dtype),
            grid_spec=pltpu.PrefetchScalarGridSpec(
                num_scalar_prefetch=0,
                grid=(gm, gn),
                in_specs=[
                    in_spec((tile_b, tile_k), lambda i, j: (i, 0)),
                    in_spec((tile_n, tile_k), lambda i, j: (j, 0)),
                    pl.BlockSpec((1, tile_n), lambda i, j: (0, j)),
                ],
                out_specs=pl.BlockSpec((tile_b, tile_n), lambda i, j: (i, j)),
            ),
            compiler_params=pltpu.CompilerParams(
                dimension_semantics=("parallel", "parallel"),
                vmem_limit_bytes=params["vmem_limit"]),
            cost_estimate=cost,
        )(xc, w, b2d)
    else:
        out_padded = pl.pallas_call(
            _linear_kernel_multi_k,
            out_shape=jax.ShapeDtypeStruct((B, out_p), out_dtype),
            grid_spec=pltpu.PrefetchScalarGridSpec(
                num_scalar_prefetch=0,
                grid=(gm, gn, gk),
                in_specs=[
                    in_spec((tile_b, tile_k), lambda i, j, k: (i, k)),
                    in_spec((tile_n, tile_k), lambda i, j, k: (j, k)),
                    pl.BlockSpec((1, tile_n), lambda i, j, k: (0, j)),
                ],
                out_specs=pl.BlockSpec((tile_b, tile_n), lambda i, j, k: (i, j)),
                scratch_shapes=[pltpu.VMEM((tile_b, tile_n), jnp.float32)],
            ),
            compiler_params=pltpu.CompilerParams(
                dimension_semantics=("parallel", "parallel", "arbitrary"),
                vmem_limit_bytes=params["vmem_limit"]),
            cost_estimate=cost,
        )(xc, w, b2d)

    if out_p != out_f:
        out_padded = out_padded[:, :out_f]
    return out_padded


def linear_classifier(x, weight, bias, *, compute_dtype=None, out_dtype=None,
                      tile_n=None, tile_k=None, input_buffering=2,
                      force_pallas=False):
    """Convenience wrapper: prepare + forward in one call.

    NOTE: in a real model, call prepare_linear_params once at parameter load
    and linear_forward per step; this wrapper re-prepares per call.
    """
    params = prepare_linear_params(weight, bias, compute_dtype=compute_dtype,
                                   tile_n=tile_n, tile_k=tile_k)
    return linear_forward(x, params, out_dtype=out_dtype,
                          input_buffering=input_buffering,
                          force_pallas=force_pallas)


# ---------------------------------------------------------------------------
# Self-test
# ---------------------------------------------------------------------------

if __name__ == "__main__":
    key = jax.random.PRNGKey(0)
    kx, kw, kb, kx2, kw2, kb2 = jax.random.split(key, 6)

    # Small shapes consistent with the module: batch=8, in=32, out=16.
    B, IN_F, OUT_F = 8, 32, 16
    bound = 1.0 / (IN_F ** 0.5)
    weight = jax.random.uniform(kw, (OUT_F, IN_F), jnp.float32, -bound, bound)
    bias = jax.random.uniform(kb, (OUT_F,), jnp.float32, -bound, bound)
    x = jax.random.normal(kx, (B, IN_F), jnp.float32)
    y_ref = x @ weight.T + bias

    # Default path: bf16 MXU feed, f32 accumulation, single-K fast-path kernel.
    # (force_pallas so the kernel itself is exercised at this tiny size.)
    y = linear_classifier(x, weight, bias, force_pallas=True)
    jax.block_until_ready(y)
    assert y.shape == (B, OUT_F) and y.dtype == x.dtype
    assert jnp.allclose(y, y_ref, atol=5e-2, rtol=5e-2)

    # Explicit f32 feed path (tighter numerics).
    y32 = linear_classifier(x, weight, bias, compute_dtype=jnp.float32,
                            force_pallas=True)
    jax.block_until_ready(y32)
    assert jnp.allclose(y32, y_ref, atol=1e-3, rtol=1e-3)

    # Exercise the multi-K accumulator kernel with small tile overrides.
    B2, IN2, OUT2 = 16, 256, 256
    bound2 = 1.0 / (IN2 ** 0.5)
    w2 = jax.random.uniform(kw2, (OUT2, IN2), jnp.float32, -bound2, bound2)
    b2 = jax.random.uniform(kb2, (OUT2,), jnp.float32, -bound2, bound2)
    x2 = jax.random.normal(kx2, (B2, IN2), jnp.float32)
    y2_ref = x2 @ w2.T + b2
    y2 = linear_classifier(x2, w2, b2, tile_n=128, tile_k=128, force_pallas=True)
    jax.block_until_ready(y2)
    assert y2.shape == (B2, OUT2)
    assert jnp.allclose(y2, y2_ref, atol=5e-2, rtol=5e-2)

    print("KERNEL_OK")
</pallas_src>

<mosaic_0001>
module attributes {stable_mosaic.version = 11 : i64} {
  func.func @_linear_kernel_single_k(%arg0: i32, %arg1: i32, %arg2: memref<8x128xbf16, #tpu.memory_space<vmem>>, %arg3: memref<128x128xbf16, #tpu.memory_space<vmem>>, %arg4: memref<1x128xf32, #tpu.memory_space<vmem>>, %arg5: memref<8x128xf32, #tpu.memory_space<vmem>>) attributes {dimension_semantics = [#tpu.dimension_semantics<parallel>, #tpu.dimension_semantics<parallel>], iteration_bounds = array<i64: 1, 1>, scalar_prefetch = 0 : i64, scratch_operands = 0 : i64, tpu.core_type = #tpu.core_type<tc>, window_params = [{transform_indices = @transform_0, window_bounds = array<i64: 8, 128>}, {transform_indices = @transform_1, window_bounds = array<i64: 128, 128>}, {transform_indices = @transform_2, window_bounds = array<i64: 1, 128>}, {transform_indices = @transform_3, window_bounds = array<i64: 8, 128>}]} {
    %c0 = arith.constant 0 : index
    %c0_0 = arith.constant 0 : index
    %0 = vector.load %arg2[%c0, %c0_0] : memref<8x128xbf16, #tpu.memory_space<vmem>>, vector<8x128xbf16>
    %c0_1 = arith.constant 0 : index
    %c0_2 = arith.constant 0 : index
    %1 = vector.load %arg3[%c0_1, %c0_2] : memref<128x128xbf16, #tpu.memory_space<vmem>>, vector<128x128xbf16>
    %cst = arith.constant dense<0.000000e+00> : vector<8x128xf32>
    %2 = tpu.matmul %0, %1, %cst {dimension_numbers = #tpu.dot_dimension_numbers<[1], [1], [0], [0], [0, 0, 1, 0], [], []>} : vector<8x128xbf16>, vector<128x128xbf16>, vector<8x128xf32> -> vector<8x128xf32>
    %c0_3 = arith.constant 0 : index
    %c0_4 = arith.constant 0 : index
    %3 = vector.load %arg4[%c0_3, %c0_4] : memref<1x128xf32, #tpu.memory_space<vmem>>, vector<1x128xf32>
    %4 = vector.broadcast %3 : vector<1x128xf32> to vector<8x128xf32>
    %5 = arith.addf %2, %4 : vector<8x128xf32>
    %c0_5 = arith.constant 0 : index
    %c0_6 = arith.constant 0 : index
    %6 = vector.load %arg5[%c0_5, %c0_6] : memref<8x128xf32, #tpu.memory_space<vmem>>, vector<8x128xf32>
    tpu.vector_store %arg5[%c0_5, %c0_6], %5 {strides = array<i32>} : memref<8x128xf32, #tpu.memory_space<vmem>>, vector<8x128xf32>,
    return
  }
  func.func @transform_0(%arg0: i32, %arg1: i32) -> (i32, i32) {
    %c0_i32 = arith.constant 0 : i32
    %c0_i32_0 = arith.constant 0 : i32
    return %arg0, %c0_i32 : i32, i32
  }
  func.func @transform_1(%arg0: i32, %arg1: i32) -> (i32, i32) {
    %c0_i32 = arith.constant 0 : i32
    %c0_i32_0 = arith.constant 0 : i32
    return %arg1, %c0_i32 : i32, i32
  }
  func.func @transform_2(%arg0: i32, %arg1: i32) -> (i32, i32) {
    %c0_i32 = arith.constant 0 : i32
    %c0_i32_0 = arith.constant 0 : i32
    return %c0_i32, %arg1 : i32, i32
  }
  func.func @transform_3(%arg0: i32, %arg1: i32) -> (i32, i32) {
    %c0_i32 = arith.constant 0 : i32
    return %arg0, %arg1 : i32, i32
  }
}

</mosaic_0001>

<llo_original>
// kernel: tpu_custom_call.1
$region0: #{tpu_custom_call.1}
  #allocation0 [shape = 'u32[]', space=smem, size = 0x4, offset = 0x4, fixed_abs, tag = 'smem constant byte address 0x4 - core index']
  #allocation1 [shape = 'u32[72,128]{1,0:T(1,128)}', space=vmem, size = 0x9000, scoped, tag = 'internal scratch']
  %s0 = inlined_call_operand.hbm [shape: bf16[8,128], index: 0, kind: input, shape index: {}]
  %s1 = inlined_call_operand.hbm [shape: bf16[128,128], index: 1, kind: input, shape index: {}]
  %s2 = inlined_call_operand.vmem [shape: f32[1,128], index: 2, kind: input, shape index: {}]
  %s3 = inlined_call_operand.hbm [shape: f32[8,128], index: 3, kind: output, shape index: {}]
  %s4 = sld [smem:[#allocation0]]
  $region30: #{tpu_custom_call.1} parent=0
    _
  %s6 = ssub.s32 1, %s4
  %s7 = scalar_select 0, %s6, %s4
  $region1: #{tpu_custom_call.1} parent=0
    #allocation2 [shape = 'u8[2048]{0}', space=vmem, size = 0x800, scoped, tag = 'input window, operand 0, single buffered']
    #allocation3 [shape = 's32[1]{0}', space=sflag, size = 0x4, scoped, tag = 'scoped memory for tpu_custom_call.1']
    #allocation4 [shape = 's32[1]{0}', space=sflag, size = 0x4, scoped, tag = 'scoped memory for tpu_custom_call.1']
    #allocation5 [shape = 'u8[32768]{0}', space=vmem, size = 0x8000, scoped, tag = 'input window, operand 1, single buffered']
    #allocation6 [shape = 's32[1]{0}', space=sflag, size = 0x4, scoped, tag = 'scoped memory for tpu_custom_call.1']
    #allocation7 [shape = 'u8[4096]{0}', space=vmem, size = 0x1000, scoped, tag = 'output window, operand 0, single buffered']
    %8 = vsyncpa [#allocation3], 0
    %9 = vsyncpa [#allocation6], 0
    %10 = vsyncpa [#allocation4], 0
    // Predicated region
    $region2: #{tpu_custom_call.1} parent=1 // pred_check
      _
    $region3: #{tpu_custom_call.1} parent=1 // pred_check_branch
      %12 = sbr.rel (0) target = $region5
    $region4: #{tpu_custom_call.1} parent=1 // pred_region
      %14 = vsyncadd [#allocation3], 0
      %s16 = sshll.u32 %s0, 4
      %s17 = int_to_ptr.hbm [resolvable:$true] %s16
      %s18 = sshll.u32 [#allocation2], 4
      %s19 = int_to_ptr.vmem [resolvable:$true] %s18
      %21 = dma.hbm_to_vmem [thread:$0]  %s17, 64, %s19, [#allocation3]
    $region5: #{tpu_custom_call.1} parent=1 // pred_fallthru
      _
    // Predicated region
    $region6: #{tpu_custom_call.1} parent=1 // pred_check
      _
    $region7: #{tpu_custom_call.1} parent=1 // pred_check_branch
      %23 = sbr.rel (0) target = $region9
    $region8: #{tpu_custom_call.1} parent=1 // pred_region
      %25 = vsyncadd [#allocation6], 0
      %s26 = sshll.u32 %s1, 4
      %s27 = int_to_ptr.hbm [resolvable:$true] %s26
      %s28 = sshll.u32 [#allocation5], 4
      %s29 = int_to_ptr.vmem [resolvable:$true] %s28
      %34 = dma.hbm_to_vmem [thread:$0]  %s27, 1024, %s29, [#allocation6], 64, 64, 4
    $region9: #{tpu_custom_call.1} parent=1 // pred_fallthru
      _
    // Predicated region
    $region10: #{tpu_custom_call.1} parent=1 // pred_check
      _
    $region11: #{tpu_custom_call.1} parent=1 // pred_check_branch
      %36 = sbr.rel (0) target = $region13
    $region12: #{tpu_custom_call.1} parent=1 // pred_region
      _
    $region13: #{tpu_custom_call.1} parent=1 // pred_fallthru
      _
    // Predicated region
    $region14: #{tpu_custom_call.1} parent=1 // pred_check
      _
    $region15: #{tpu_custom_call.1} parent=1 // pred_check_branch
      %38 = sbr.rel (0) target = $region17
    $region16: #{tpu_custom_call.1} parent=1 // pred_region
      %40 = dma.done [#allocation3], 64
    $region17: #{tpu_custom_call.1} parent=1 // pred_fallthru
      _
    // Predicated region
    $region18: #{tpu_custom_call.1} parent=1 // pred_check
      _
    $region19: #{tpu_custom_call.1} parent=1 // pred_check_branch
      %42 = sbr.rel (0) target = $region21
    $region20: #{tpu_custom_call.1} parent=1 // pred_region
      %44 = dma.done [#allocation6], 1024
    $region21: #{tpu_custom_call.1} parent=1 // pred_fallthru
      _
    %v45 = vld [vmem:[#allocation2] sm:$0xf]
    %v46 = vld [vmem:[#allocation5] sm:$0xf]
    %v47 = vld [vmem:[#allocation5 + $0x4] sm:$0xf]
    %v48 = vld [vmem:[#allocation5 + $0x8] sm:$0xf]
    %v49 = vld [vmem:[#allocation5 + $0xc] sm:$0xf]
    %v50 = vld [vmem:[#allocation5 + $0x10] sm:$0xf]
    %v51 = vld [vmem:[#allocation5 + $0x14] sm:$0xf]
    %v52 = vld [vmem:[#allocation5 + $0x18] sm:$0xf]
    %v53 = vld [vmem:[#allocation5 + $0x1c] sm:$0xf]
    %v54 = vld [vmem:[#allocation5 + $0x20] sm:$0xf]
    %v55 = vld [vmem:[#allocation5 + $0x24] sm:$0xf]
    %v56 = vld [vmem:[#allocation5 + $0x28] sm:$0xf]
    %v57 = vld [vmem:[#allocation5 + $0x2c] sm:$0xf]
    %v58 = vld [vmem:[#allocation5 + $0x30] sm:$0xf]
    %v59 = vld [vmem:[#allocation5 + $0x34] sm:$0xf]
    %v60 = vld [vmem:[#allocation5 + $0x38] sm:$0xf]
    %v61 = vld [vmem:[#allocation5 + $0x3c] sm:$0xf]
    %v62 = vld [vmem:[%s2] sm:$0x1]
    %v64 = vperm.slane %v62, 0
    %v82 = vunpack.c.l.b16 %v46
    %v83 = vunpack.c.l.b16 %v47
    %v84 = vunpack.c.l.b16 %v48
    %v85 = vunpack.c.l.b16 %v49
    %v86 = vunpack.c.l.b16 %v50
    %v87 = vunpack.c.l.b16 %v51
    %v88 = vunpack.c.l.b16 %v52
    %v89 = vunpack.c.l.b16 %v53
    %v90 = vunpack.c.l.b16 %v54
    %v91 = vunpack.c.l.b16 %v55
    %v92 = vunpack.c.l.b16 %v56
    %v93 = vunpack.c.l.b16 %v57
    %v94 = vunpack.c.l.b16 %v58
    %v95 = vunpack.c.l.b16 %v59
    %v96 = vunpack.c.l.b16 %v60
    %v97 = vunpack.c.l.b16 %v61
    %v98 = vpack.c.b16 %v83, %v82
    %v99 = vpack.c.b16 %v85, %v84
    %v100 = vpack.c.b16 %v87, %v86
    %v101 = vpack.c.b16 %v89, %v88
    %v102 = vpack.c.b16 %v91, %v90
    %v103 = vpack.c.b16 %v93, %v92
    %v104 = vpack.c.b16 %v95, %v94
    %v105 = vpack.c.b16 %v97, %v96
    %114 = vmatpush.bf16.xpose.msra.mxu0 %v105
    %115 = vmatpush.bf16.xpose.msra.mxu0 %v104
    %116 = vmatpush.bf16.xpose.msra.mxu0 %v103
    %117 = vmatpush.bf16.xpose.msra.mxu0 %v102
    %118 = vmatpush.bf16.xpose.msra.mxu0 %v101
    %119 = vmatpush.bf16.xpose.msra.mxu0 %v100
    %120 = vmatpush.bf16.xpose.msra.mxu0 %v99
    %121 = vmatpush.bf16.xpose.msra.mxu0 %v98
    %122 = vmatmul.bf16.gmra.mxu0 %v45
    %v123 = vpop.f32.mrf.mxu0
    %v124 = vadd.f32 %v64, %v123
    %v125 = vpop.f32.mrf.mxu0
    %126 = vdwg.mxu0
    %127 = vst [vmem:[#allocation7] sm:$0xff] %v124
    // Predicated region
    $region22: #{tpu_custom_call.1} parent=1 // pred_check
      _
    $region23: #{tpu_custom_call.1} parent=1 // pred_check_branch
      %129 = sbr.rel (0) target = $region25
    $region24: #{tpu_custom_call.1} parent=1 // pred_region
      %131 = vsyncadd [#allocation4], 0
      %s133 = sshll.u32 [#allocation7], 4
      %s134 = int_to_ptr.vmem [resolvable:$true] %s133
      %s135 = sshll.u32 %s3, 4
      %s136 = int_to_ptr.hbm [resolvable:$true] %s135
      %138 = dma.vmem_to_hbm [thread:$0]  %s134, 128, %s136, [#allocation4]
    $region25: #{tpu_custom_call.1} parent=1 // pred_fallthru
      _
    // Predicated region
    $region26: #{tpu_custom_call.1} parent=1 // pred_check
      _
    $region27: #{tpu_custom_call.1} parent=1 // pred_check_branch
      %140 = sbr.rel (0) target = $region29
    $region28: #{tpu_custom_call.1} parent=1 // pred_region
      %142 = dma.done [#allocation4], 128
    $region29: #{tpu_custom_call.1} parent=1 // pred_fallthru
      _
    %143 = vsyncpa [#allocation3], 1
    %144 = vsyncpa [#allocation6], 1
    %145 = vsyncpa [#allocation4], 1

</llo_original>
